<compile_context>
chip_gen: v7x
topology: tpu7x:2x2x1
jax: 0.10.0
libtpu: 0.0.40
codegen_flags: <defaults>
</compile_context>

<pallas_src>
import jax
import jax.numpy as jnp
from jax.experimental import pallas as pl
from jax.experimental.pallas import tpu as pltpu


def _round_up(x, m):
    return (x + m - 1) // m * m


def _mlp_kernel(x_ref, w1_ref, b1_ref, w2_ref, b2_ref, wo_ref, bo_ref, o_ref):
    """Fused 3-layer MLP forward for one row-tile of the input.

    x_ref : (tm, D_in_p)                       VMEM (f32 or bf16)
    w*_ref: (D_in_p, H1_p), (H1_p, H2_p), (H2_p, D_out_p)  full weights in VMEM
    b*_ref: (1, H1_p), (1, H2_p), (1, D_out_p) f32
    o_ref : (tm, D_out_p)                      f32, lane-dense
    """
    x = x_ref[...]

    # hidden layer 1: tanh(x @ W1 + b1)  (f32 accumulation on the MXU)
    h = jnp.dot(x, w1_ref[...], preferred_element_type=jnp.float32)
    h = jnp.tanh(h + b1_ref[...])
    h = h.astype(w2_ref.dtype)

    # hidden layer 2: tanh(h @ W2 + b2)
    h = jnp.dot(h, w2_ref[...], preferred_element_type=jnp.float32)
    h = jnp.tanh(h + b2_ref[...])
    h = h.astype(wo_ref.dtype)

    # output layer (no activation)
    out = jnp.dot(h, wo_ref[...], preferred_element_type=jnp.float32)
    out = out + bo_ref[...]

    o_ref[...] = out.astype(o_ref.dtype)


def linears_forward(x, params, *, tm=512, compute_dtype=jnp.float32):
    """Run the Linears MLP via a single fused Pallas kernel.

    x      : (..., in_features) float32
    params : dict with keys w1,b1,w2,b2,wo,bo ; weights shaped (in, out), f32
    tm     : row tile (rows per grid step); clamped for small inputs
    compute_dtype : dtype for x/weights fed to the MXU (f32 or bf16);
                    accumulation, biases and tanh stay f32.
    """
    lead_shape = x.shape[:-1]
    d_in = x.shape[-1]
    x2d = x.reshape(-1, d_in)
    n = x2d.shape[0]

    w1, b1 = params["w1"], params["b1"]
    w2, b2 = params["w2"], params["b2"]
    wo, bo = params["wo"], params["bo"]
    h1, h2, d_out = w1.shape[1], w2.shape[1], wo.shape[1]

    # Lane-pad every feature dim to a multiple of 128.  Zero padding is exact:
    # padded input columns hit zero weight rows, padded hidden units are
    # tanh(0 + 0) = 0 and feed zero weight rows of the next layer, and padded
    # output columns are sliced off below.
    d_in_p = _round_up(d_in, 128)
    h1_p = _round_up(h1, 128)
    h2_p = _round_up(h2, 128)
    d_out_p = _round_up(d_out, 128)

    def pad2(a, rows, cols):
        return jnp.pad(a, ((0, rows - a.shape[0]), (0, cols - a.shape[1])))

    w1p = pad2(w1, d_in_p, h1_p).astype(compute_dtype)
    w2p = pad2(w2, h1_p, h2_p).astype(compute_dtype)
    wop = pad2(wo, h2_p, d_out_p).astype(compute_dtype)
    b1p = pad2(b1, 1, h1_p).astype(jnp.float32)
    b2p = pad2(b2, 1, h2_p).astype(jnp.float32)
    bop = pad2(bo, 1, d_out_p).astype(jnp.float32)

    # Row tile: keep it a multiple of 8 sublanes, clamp for tiny inputs, and
    # pad the row count up to a multiple of the tile (no divisibility assert).
    tm_eff = max(8, min(tm, _round_up(n, 8)))
    n_pad = _round_up(n, tm_eff)
    xp = pad2(x2d, n_pad, d_in_p).astype(compute_dtype)

    grid = (n_pad // tm_eff,)

    # Weights/biases use a constant index_map -> resident across all grid steps.
    full = lambda shape: pl.BlockSpec(shape, lambda i: (0, 0))

    out2d = pl.pallas_call(
        _mlp_kernel,
        out_shape=jax.ShapeDtypeStruct((n_pad, d_out_p), jnp.float32),
        grid_spec=pltpu.PrefetchScalarGridSpec(
            num_scalar_prefetch=0,
            grid=grid,
            in_specs=[
                pl.BlockSpec((tm_eff, d_in_p), lambda i: (i, 0)),  # x row-tile
                full(w1p.shape), full(b1p.shape),
                full(w2p.shape), full(b2p.shape),
                full(wop.shape), full(bop.shape),
            ],
            out_specs=pl.BlockSpec((tm_eff, d_out_p), lambda i: (i, 0)),
        ),
        compiler_params=pltpu.CompilerParams(
            # Row axis is independent work -> megacore-shardable on v7x.
            dimension_semantics=("parallel",),
            # Headroom for large row tiles; still well under v7x's 64 MiB VMEM.
            vmem_limit_bytes=64 * 1024 * 1024,
        ),
    )(xp, w1p, b1p, w2p, b2p, wop, bop)

    # Strip row + lane padding outside the kernel (nearly free).
    return out2d[:n, :d_out].reshape(*lead_shape, d_out)


def _orthogonal(key, out_features, in_features):
    """Deterministic orthogonal init matching torch.nn.init.orthogonal_ semantics
    (orthonormal rows/cols for a (out, in) weight)."""
    init = jax.nn.initializers.orthogonal()
    return init(key, (out_features, in_features), jnp.float32)


def make_params(key, in_features, hiddens, out_features):
    """Build deterministic parameters for Linears(in_features, out_features, hiddens).

    Weights are orthogonal (as in the PyTorch Linear subclass); biases use the
    standard nn.Linear uniform(-1/sqrt(fan_in), 1/sqrt(fan_in)) init.
    Weights are returned already transposed to (in, out) for x @ W.
    """
    assert len(hiddens) == 2, "this script fixes the depth at 2 hidden layers"
    h1, h2 = hiddens
    keys = jax.random.split(key, 6)

    def bias(k, fan_in, fan_out):
        bound = 1.0 / jnp.sqrt(fan_in)
        return jax.random.uniform(k, (1, fan_out), jnp.float32, -bound, bound)

    w1 = _orthogonal(keys[0], h1, in_features).T          # (in, h1)
    b1 = bias(keys[1], in_features, h1)
    w2 = _orthogonal(keys[2], h2, h1).T                   # (h1, h2)
    b2 = bias(keys[3], h1, h2)
    wo = _orthogonal(keys[4], out_features, h2).T         # (h2, out)
    bo = bias(keys[5], h2, out_features)

    return dict(w1=w1, b1=b1, w2=w2, b2=b2, wo=wo, bo=bo)


def _reference(x, p):
    """Plain-JAX reference of the PyTorch forward."""
    h = jnp.tanh(x @ p["w1"] + p["b1"][0])
    h = jnp.tanh(h @ p["w2"] + p["b2"][0])
    return h @ p["wo"] + p["bo"][0]


if __name__ == "__main__":
    key = jax.random.PRNGKey(0)
    k_x, k_p = jax.random.split(key)

    batch, seq = 2, 8
    in_features, hiddens, out_features = 32, [64, 48], 16

    x = jax.random.normal(k_x, (batch, seq, in_features), jnp.float32)
    params = make_params(k_p, in_features, hiddens, out_features)

    ref = _reference(x.reshape(-1, in_features), params).reshape(
        batch, seq, out_features
    )

    # f32 path (exact parity with the PyTorch reference).
    out = linears_forward(x, params)
    out = jax.block_until_ready(out)
    assert out.shape == (batch, seq, out_features)
    assert jnp.allclose(out, ref, atol=1e-5, rtol=1e-5), "f32 mismatch vs reference"

    # bf16 compute path (v6e/v7x fast path): bf16 operands, f32 accumulation.
    out_bf16 = linears_forward(x, params, compute_dtype=jnp.bfloat16)
    out_bf16 = jax.block_until_ready(out_bf16)
    assert out_bf16.shape == (batch, seq, out_features)
    assert jnp.allclose(out_bf16, ref, atol=1e-1, rtol=1e-1), "bf16 drift too large"

    print("KERNEL_OK")
</pallas_src>

<mosaic_0001>
module attributes {stable_mosaic.version = 11 : i64} {
  func.func @_mlp_kernel(%arg0: i32, %arg1: memref<16x128xf32, #tpu.memory_space<vmem>>, %arg2: memref<128x128xf32, #tpu.memory_space<vmem>>, %arg3: memref<1x128xf32, #tpu.memory_space<vmem>>, %arg4: memref<128x128xf32, #tpu.memory_space<vmem>>, %arg5: memref<1x128xf32, #tpu.memory_space<vmem>>, %arg6: memref<128x128xf32, #tpu.memory_space<vmem>>, %arg7: memref<1x128xf32, #tpu.memory_space<vmem>>, %arg8: memref<16x128xf32, #tpu.memory_space<vmem>>) attributes {dimension_semantics = [#tpu.dimension_semantics<parallel>], iteration_bounds = array<i64: 1>, scalar_prefetch = 0 : i64, scratch_operands = 0 : i64, tpu.core_type = #tpu.core_type<tc>, window_params = [{transform_indices = @transform_0, window_bounds = array<i64: 16, 128>}, {pipeline_mode = #tpu.pipeline_mode<synchronous>, transform_indices = @transform_1, window_bounds = array<i64: 128, 128>}, {pipeline_mode = #tpu.pipeline_mode<synchronous>, transform_indices = @transform_2, window_bounds = array<i64: 1, 128>}, {pipeline_mode = #tpu.pipeline_mode<synchronous>, transform_indices = @transform_3, window_bounds = array<i64: 128, 128>}, {pipeline_mode = #tpu.pipeline_mode<synchronous>, transform_indices = @transform_4, window_bounds = array<i64: 1, 128>}, {pipeline_mode = #tpu.pipeline_mode<synchronous>, transform_indices = @transform_5, window_bounds = array<i64: 128, 128>}, {pipeline_mode = #tpu.pipeline_mode<synchronous>, transform_indices = @transform_6, window_bounds = array<i64: 1, 128>}, {transform_indices = @transform_7, window_bounds = array<i64: 16, 128>}]} {
    %c0 = arith.constant 0 : index
    %c0_0 = arith.constant 0 : index
    %0 = vector.load %arg1[%c0, %c0_0] : memref<16x128xf32, #tpu.memory_space<vmem>>, vector<16x128xf32>
    %c0_1 = arith.constant 0 : index
    %c0_2 = arith.constant 0 : index
    %1 = vector.load %arg2[%c0_1, %c0_2] : memref<128x128xf32, #tpu.memory_space<vmem>>, vector<128x128xf32>
    %cst = arith.constant dense<0.000000e+00> : vector<16x128xf32>
    %2 = tpu.matmul %0, %1, %cst {dimension_numbers = #tpu.dot_dimension_numbers<[1], [0], [0], [1], [0, 0, 1, 1], [], []>} : vector<16x128xf32>, vector<128x128xf32>, vector<16x128xf32> -> vector<16x128xf32>
    %c0_3 = arith.constant 0 : index
    %c0_4 = arith.constant 0 : index
    %3 = vector.load %arg3[%c0_3, %c0_4] : memref<1x128xf32, #tpu.memory_space<vmem>>, vector<1x128xf32>
    %4 = vector.broadcast %3 : vector<1x128xf32> to vector<16x128xf32>
    %5 = arith.addf %2, %4 : vector<16x128xf32>
    %6 = math.tanh %5 : vector<16x128xf32>
    %c0_5 = arith.constant 0 : index
    %c0_6 = arith.constant 0 : index
    %7 = vector.load %arg4[%c0_5, %c0_6] : memref<128x128xf32, #tpu.memory_space<vmem>>, vector<128x128xf32>
    %cst_7 = arith.constant dense<0.000000e+00> : vector<16x128xf32>
    %8 = tpu.matmul %6, %7, %cst_7 {dimension_numbers = #tpu.dot_dimension_numbers<[1], [0], [0], [1], [0, 0, 1, 1], [], []>} : vector<16x128xf32>, vector<128x128xf32>, vector<16x128xf32> -> vector<16x128xf32>
    %c0_8 = arith.constant 0 : index
    %c0_9 = arith.constant 0 : index
    %9 = vector.load %arg5[%c0_8, %c0_9] : memref<1x128xf32, #tpu.memory_space<vmem>>, vector<1x128xf32>
    %10 = vector.broadcast %9 : vector<1x128xf32> to vector<16x128xf32>
    %11 = arith.addf %8, %10 : vector<16x128xf32>
    %12 = math.tanh %11 : vector<16x128xf32>
    %c0_10 = arith.constant 0 : index
    %c0_11 = arith.constant 0 : index
    %13 = vector.load %arg6[%c0_10, %c0_11] : memref<128x128xf32, #tpu.memory_space<vmem>>, vector<128x128xf32>
    %cst_12 = arith.constant dense<0.000000e+00> : vector<16x128xf32>
    %14 = tpu.matmul %12, %13, %cst_12 {dimension_numbers = #tpu.dot_dimension_numbers<[1], [0], [0], [1], [0, 0, 1, 1], [], []>} : vector<16x128xf32>, vector<128x128xf32>, vector<16x128xf32> -> vector<16x128xf32>
    %c0_13 = arith.constant 0 : index
    %c0_14 = arith.constant 0 : index
    %15 = vector.load %arg7[%c0_13, %c0_14] : memref<1x128xf32, #tpu.memory_space<vmem>>, vector<1x128xf32>
    %16 = vector.broadcast %15 : vector<1x128xf32> to vector<16x128xf32>
    %17 = arith.addf %14, %16 : vector<16x128xf32>
    %c0_15 = arith.constant 0 : index
    %c0_16 = arith.constant 0 : index
    %18 = vector.load %arg8[%c0_15, %c0_16] : memref<16x128xf32, #tpu.memory_space<vmem>>, vector<16x128xf32>
    tpu.vector_store %arg8[%c0_15, %c0_16], %17 {strides = array<i32>} : memref<16x128xf32, #tpu.memory_space<vmem>>, vector<16x128xf32>,
    return
  }
  func.func @transform_0(%arg0: i32) -> (i32, i32) {
    %c0_i32 = arith.constant 0 : i32
    %c0_i32_0 = arith.constant 0 : i32
    return %arg0, %c0_i32 : i32, i32
  }
  func.func @transform_1(%arg0: i32) -> (i32, i32) {
    %c0_i32 = arith.constant 0 : i32
    %c0_i32_0 = arith.constant 0 : i32
    %c0_i32_1 = arith.constant 0 : i32
    return %c0_i32, %c0_i32_0 : i32, i32
  }
  func.func @transform_2(%arg0: i32) -> (i32, i32) {
    %c0_i32 = arith.constant 0 : i32
    %c0_i32_0 = arith.constant 0 : i32
    %c0_i32_1 = arith.constant 0 : i32
    return %c0_i32, %c0_i32_0 : i32, i32
  }
  func.func @transform_3(%arg0: i32) -> (i32, i32) {
    %c0_i32 = arith.constant 0 : i32
    %c0_i32_0 = arith.constant 0 : i32
    %c0_i32_1 = arith.constant 0 : i32
    return %c0_i32, %c0_i32_0 : i32, i32
  }
  func.func @transform_4(%arg0: i32) -> (i32, i32) {
    %c0_i32 = arith.constant 0 : i32
    %c0_i32_0 = arith.constant 0 : i32
    %c0_i32_1 = arith.constant 0 : i32
    return %c0_i32, %c0_i32_0 : i32, i32
  }
  func.func @transform_5(%arg0: i32) -> (i32, i32) {
    %c0_i32 = arith.constant 0 : i32
    %c0_i32_0 = arith.constant 0 : i32
    %c0_i32_1 = arith.constant 0 : i32
    return %c0_i32, %c0_i32_0 : i32, i32
  }
  func.func @transform_6(%arg0: i32) -> (i32, i32) {
    %c0_i32 = arith.constant 0 : i32
    %c0_i32_0 = arith.constant 0 : i32
    %c0_i32_1 = arith.constant 0 : i32
    return %c0_i32, %c0_i32_0 : i32, i32
  }
  func.func @transform_7(%arg0: i32) -> (i32, i32) {
    %c0_i32 = arith.constant 0 : i32
    %c0_i32_0 = arith.constant 0 : i32
    return %arg0, %c0_i32 : i32, i32
  }
}

</mosaic_0001>

<llo_original>
// kernel: tpu_custom_call.1
$region0: #{tpu_custom_call.1}
  #allocation0 [shape = 'u32[]', space=smem, size = 0x4, offset = 0x4, fixed_abs, tag = 'smem constant byte address 0x4 - core index']
  #allocation1 [shape = 'u32[144,128]{1,0:T(1,128)}', space=vmem, size = 0x12000, scoped, tag = 'internal scratch']
  %s0 = inlined_call_operand.hbm [shape: f32[16,128], index: 0, kind: input, shape index: {}]
  %s1 = inlined_call_operand.hbm [shape: f32[128,128], index: 1, kind: input, shape index: {}]
  %s2 = inlined_call_operand.hbm [shape: f32[1,128], index: 2, kind: input, shape index: {}]
  %s3 = inlined_call_operand.hbm [shape: f32[128,128], index: 3, kind: input, shape index: {}]
  %s4 = inlined_call_operand.hbm [shape: f32[1,128], index: 4, kind: input, shape index: {}]
  %s5 = inlined_call_operand.hbm [shape: f32[128,128], index: 5, kind: input, shape index: {}]
  %s6 = inlined_call_operand.hbm [shape: f32[1,128], index: 6, kind: input, shape index: {}]
  %s7 = inlined_call_operand.hbm [shape: f32[16,128], index: 7, kind: output, shape index: {}]
  %s8 = sld [smem:[#allocation0]]
  $region66: #{tpu_custom_call.1} parent=0
    _
  %s10 = ssub.s32 1, %s8
  %s11 = scalar_select 0, %s10, %s8
  $region1: #{tpu_custom_call.1} parent=0
    #allocation2 [shape = 'u8[8192]{0}', space=vmem, size = 0x2000, scoped, tag = 'input window, operand 0, single buffered']
    #allocation3 [shape = 's32[1]{0}', space=sflag, size = 0x4, scoped, tag = 'scoped memory for tpu_custom_call.1']
    #allocation4 [shape = 's32[1]{0}', space=sflag, size = 0x4, scoped, tag = 'scoped memory for tpu_custom_call.1']
    #allocation5 [shape = 'u8[65536]{0}', space=vmem, size = 0x10000, scoped, tag = 'input window, operand 1, single buffered']
    #allocation6 [shape = 's32[1]{0}', space=sflag, size = 0x4, scoped, tag = 'scoped memory for tpu_custom_call.1']
    #allocation7 [shape = 'u8[512]{0}', space=vmem, size = 0x400, scoped, tag = 'input window, operand 2, single buffered']
    #allocation8 [shape = 'u8[65536]{0}', space=vmem, size = 0x10000, scoped, tag = 'input window, operand 3, single buffered']
    #allocation9 [shape = 's32[1]{0}', space=sflag, size = 0x4, scoped, tag = 'scoped memory for tpu_custom_call.1']
    #allocation10 [shape = 'u8[512]{0}', space=vmem, size = 0x400, scoped, tag = 'input window, operand 4, single buffered']
    #allocation11 [shape = 'u8[65536]{0}', space=vmem, size = 0x10000, scoped, tag = 'input window, operand 5, single buffered']
    #allocation12 [shape = 's32[1]{0}', space=sflag, size = 0x4, scoped, tag = 'scoped memory for tpu_custom_call.1']
    #allocation13 [shape = 'u8[512]{0}', space=vmem, size = 0x400, scoped, tag = 'input window, operand 6, single buffered']
    #allocation14 [shape = 'u8[8192]{0}', space=vmem, size = 0x2000, scoped, tag = 'output window, operand 0, single buffered']
    %12 = vsyncpa [#allocation3], 0
    %13 = vsyncpa [#allocation6], 0
    %14 = vsyncpa [#allocation9], 0
    %15 = vsyncpa [#allocation12], 0
    %16 = vsyncpa [#allocation4], 0
    // Predicated region
    $region2: #{tpu_custom_call.1} parent=1 // pred_check
      _
    $region3: #{tpu_custom_call.1} parent=1 // pred_check_branch
      %18 = sbr.rel (0) target = $region5
    $region4: #{tpu_custom_call.1} parent=1 // pred_region
      %s20 = ssub.s32 256, 256
      %21 = vsyncadd [#allocation3], %s20
      %s22 = sshll.u32 [#allocation2], 4
      %s23 = int_to_ptr.vmem [resolvable:$true] %s22
      %28 = dma.hbm_to_vmem [thread:$0]  %s0, 256, %s23, [#allocation3], 128, 128, 8
    $region5: #{tpu_custom_call.1} parent=1 // pred_fallthru
      _
    // Predicated region
    $region6: #{tpu_custom_call.1} parent=1 // pred_check
      _
    $region7: #{tpu_custom_call.1} parent=1 // pred_check_branch
      %30 = sbr.rel (0) target = $region9
    $region8: #{tpu_custom_call.1} parent=1 // pred_region
      %s32 = ssub.s32 2048, 2048
      %33 = vsyncadd [#allocation6], %s32
      %s34 = sshll.u32 [#allocation5], 4
      %s35 = int_to_ptr.vmem [resolvable:$true] %s34
      %40 = dma.hbm_to_vmem [thread:$0]  %s1, 2048, %s35, [#allocation6], 128, 128, 8
    $region9: #{tpu_custom_call.1} parent=1 // pred_fallthru
      _
    // Predicated region
    $region10: #{tpu_custom_call.1} parent=1 // pred_check
      _
    $region11: #{tpu_custom_call.1} parent=1 // pred_check_branch
      %42 = sbr.rel (0) target = $region13
    $region12: #{tpu_custom_call.1} parent=1 // pred_region
      %s44 = ssub.s32 16, 16
      %45 = vsyncadd [#allocation6], %s44
      %s47 = sshll.u32 [#allocation7], 4
      %s48 = int_to_ptr.vmem [resolvable:$true] %s47
      %50 = dma.hbm_to_vmem [thread:$0]  %s2, 16, %s48, [#allocation6]
    $region13: #{tpu_custom_call.1} parent=1 // pred_fallthru
      _
    // Predicated region
    $region14: #{tpu_custom_call.1} parent=1 // pred_check
      _
    $region15: #{tpu_custom_call.1} parent=1 // pred_check_branch
      %52 = sbr.rel (0) target = $region17
    $region16: #{tpu_custom_call.1} parent=1 // pred_region
      %s54 = ssub.s32 2048, 2048
      %55 = vsyncadd [#allocation9], %s54
      %s56 = sshll.u32 [#allocation8], 4
      %s57 = int_to_ptr.vmem [resolvable:$true] %s56
      %62 = dma.hbm_to_vmem [thread:$0]  %s3, 2048, %s57, [#allocation9], 128, 128, 8
    $region17: #{tpu_custom_call.1} parent=1 // pred_fallthru
      _
    // Predicated region
    $region18: #{tpu_custom_call.1} parent=1 // pred_check
      _
    $region19: #{tpu_custom_call.1} parent=1 // pred_check_branch
      %64 = sbr.rel (0) target = $region21
    $region20: #{tpu_custom_call.1} parent=1 // pred_region
      %s66 = ssub.s32 16, 16
      %67 = vsyncadd [#allocation9], %s66
      %s69 = sshll.u32 [#allocation10], 4
      %s70 = int_to_ptr.vmem [resolvable:$true] %s69
      %72 = dma.hbm_to_vmem [thread:$0]  %s4, 16, %s70, [#allocation9]
    $region21: #{tpu_custom_call.1} parent=1 // pred_fallthru
      _
    // Predicated region
    $region22: #{tpu_custom_call.1} parent=1 // pred_check
      _
    $region23: #{tpu_custom_call.1} parent=1 // pred_check_branch
      %74 = sbr.rel (0) target = $region25
    $region24: #{tpu_custom_call.1} parent=1 // pred_region
      %s76 = ssub.s32 2048, 2048
      %77 = vsyncadd [#allocation12], %s76
      %s78 = sshll.u32 [#allocation11], 4
      %s79 = int_to_ptr.vmem [resolvable:$true] %s78
      %84 = dma.hbm_to_vmem [thread:$0]  %s5, 2048, %s79, [#allocation12], 128, 128, 8
    $region25: #{tpu_custom_call.1} parent=1 // pred_fallthru
      _
    // Predicated region
    $region26: #{tpu_custom_call.1} parent=1 // pred_check
      _
    $region27: #{tpu_custom_call.1} parent=1 // pred_check_branch
      %86 = sbr.rel (0) target = $region29
    $region28: #{tpu_custom_call.1} parent=1 // pred_region
      %s88 = ssub.s32 16, 16
      %89 = vsyncadd [#allocation12], %s88
      %s91 = sshll.u32 [#allocation13], 4
      %s92 = int_to_ptr.vmem [resolvable:$true] %s91
      %94 = dma.hbm_to_vmem [thread:$0]  %s6, 16, %s92, [#allocation12]
    $region29: #{tpu_custom_call.1} parent=1 // pred_fallthru
      _
    // Predicated region
    $region30: #{tpu_custom_call.1} parent=1 // pred_check
      _
    $region31: #{tpu_custom_call.1} parent=1 // pred_check_branch
      %96 = sbr.rel (0) target = $region33
    $region32: #{tpu_custom_call.1} parent=1 // pred_region
      %97 = dma.done [#allocation3], 256
    $region33: #{tpu_custom_call.1} parent=1 // pred_fallthru
      _
    // Predicated region
    $region34: #{tpu_custom_call.1} parent=1 // pred_check
      _
    $region35: #{tpu_custom_call.1} parent=1 // pred_check_branch
      %99 = sbr.rel (0) target = $region37
    $region36: #{tpu_custom_call.1} parent=1 // pred_region
      %100 = dma.done [#allocation6], 2048
    $region37: #{tpu_custom_call.1} parent=1 // pred_fallthru
      _
    // Predicated region
    $region38: #{tpu_custom_call.1} parent=1 // pred_check
      _
    $region39: #{tpu_custom_call.1} parent=1 // pred_check_branch
      %102 = sbr.rel (0) target = $region41
    $region40: #{tpu_custom_call.1} parent=1 // pred_region
      %103 = dma.done [#allocation6], 16
    $region41: #{tpu_custom_call.1} parent=1 // pred_fallthru
      _
    // Predicated region
    $region42: #{tpu_custom_call.1} parent=1 // pred_check
      _
    $region43: #{tpu_custom_call.1} parent=1 // pred_check_branch
      %105 = sbr.rel (0) target = $region45
    $region44: #{tpu_custom_call.1} parent=1 // pred_region
      %106 = dma.done [#allocation9], 2048
    $region45: #{tpu_custom_call.1} parent=1 // pred_fallthru
      _
    // Predicated region
    $region46: #{tpu_custom_call.1} parent=1 // pred_check
      _
    $region47: #{tpu_custom_call.1} parent=1 // pred_check_branch
      %108 = sbr.rel (0) target = $region49
    $region48: #{tpu_custom_call.1} parent=1 // pred_region
      %109 = dma.done [#allocation9], 16
    $region49: #{tpu_custom_call.1} parent=1 // pred_fallthru
      _
    // Predicated region
    $region50: #{tpu_custom_call.1} parent=1 // pred_check
      _
    $region51: #{tpu_custom_call.1} parent=1 // pred_check_branch
      %111 = sbr.rel (0) target = $region53
    $region52: #{tpu_custom_call.1} parent=1 // pred_region
      %112 = dma.done [#allocation12], 2048
    $region53: #{tpu_custom_call.1} parent=1 // pred_fallthru
      _
    // Predicated region
    $region54: #{tpu_custom_call.1} parent=1 // pred_check
      _
    $region55: #{tpu_custom_call.1} parent=1 // pred_check_branch
      %114 = sbr.rel (0) target = $region57
    $region56: #{tpu_custom_call.1} parent=1 // pred_region
      %115 = dma.done [#allocation12], 16
    $region57: #{tpu_custom_call.1} parent=1 // pred_fallthru
      _
    %v116 = vld [vmem:[#allocation2] sm:$0xff]
    %v117 = vld [vmem:[#allocation2 + $0x8] sm:$0xff]
    %v118 = vld [vmem:[#allocation5] sm:$0xff]
    %v119 = vld [vmem:[#allocation5 + $0x8] sm:$0xff]
    %v120 = vld [vmem:[#allocation5 + $0x10] sm:$0xff]
    %v121 = vld [vmem:[#allocation5 + $0x18] sm:$0xff]
    %v122 = vld [vmem:[#allocation5 + $0x20] sm:$0xff]
    %v123 = vld [vmem:[#allocation5 + $0x28] sm:$0xff]
    %v124 = vld [vmem:[#allocation5 + $0x30] sm:$0xff]
    %v125 = vld [vmem:[#allocation5 + $0x38] sm:$0xff]
    %v126 = vld [vmem:[#allocation5 + $0x40] sm:$0xff]
    %v127 = vld [vmem:[#allocation5 + $0x48] sm:$0xff]
    %v128 = vld [vmem:[#allocation5 + $0x50] sm:$0xff]
    %v129 = vld [vmem:[#allocation5 + $0x58] sm:$0xff]
    %v130 = vld [vmem:[#allocation5 + $0x60] sm:$0xff]
    %v131 = vld [vmem:[#allocation5 + $0x68] sm:$0xff]
    %v132 = vld [vmem:[#allocation5 + $0x70] sm:$0xff]
    %v133 = vld [vmem:[#allocation5 + $0x78] sm:$0xff]
    %v134 = vld [vmem:[#allocation7] sm:$0x1]
    %v136 = vlaneseq
    %v137 = vshrl.u32 %v136, 7
    %v138 = vsub.s32 0, %v137
    %v139 = vrot.slane %v134, %v138
    %141 = vmatprep.subr.mxu0 0.0
    %142 = vmatpush1.msra.mxu0 %v118
    %143 = vmatprep.subr.mxu0 0.0
    %144 = vmatpush1.msra.mxu0 %v119
    %145 = vmatprep.subr.mxu0 0.0
    %146 = vmatpush1.msra.mxu0 %v120
    %147 = vmatprep.subr.mxu0 0.0
    %148 = vmatpush1.msra.mxu0 %v121
    %149 = vmatprep.subr.mxu0 0.0
    %150 = vmatpush1.msra.mxu0 %v122
    %151 = vmatprep.subr.mxu0 0.0
    %152 = vmatpush1.msra.mxu0 %v123
    %153 = vmatprep.subr.mxu0 0.0
    %154 = vmatpush1.msra.mxu0 %v124
    %155 = vmatprep.subr.mxu0 0.0
    %156 = vmatpush1.msra.mxu0 %v125
    %157 = vmatprep.subr.mxu0 0.0
    %158 = vmatpush1.msra.mxu0 %v126
    %159 = vmatprep.subr.mxu0 0.0
    %160 = vmatpush1.msra.mxu0 %v127
    %161 = vmatprep.subr.mxu0 0.0
    %162 = vmatpush1.msra.mxu0 %v128
    %163 = vmatprep.subr.mxu0 0.0
    %164 = vmatpush1.msra.mxu0 %v129
    %165 = vmatprep.subr.mxu0 0.0
    %166 = vmatpush1.msra.mxu0 %v130
    %167 = vmatprep.subr.mxu0 0.0
    %168 = vmatpush1.msra.mxu0 %v131
    %169 = vmatprep.subr.mxu0 0.0
    %170 = vmatpush1.msra.mxu0 %v132
    %171 = vmatprep.subr.mxu0 0.0
    %172 = vmatpush1.msra.mxu0 %v133
    %173 = vmatprep.subr.mxu0 0.0
    %174 = vmatpush1.msra.mxu0 0.0
    %175 = vmatprep.subr.mxu0 0.0
    %176 = vmatpush1.msra.mxu0 0.0
    %177 = vmatprep.subr.mxu0 0.0
    %178 = vmatpush1.msra.mxu0 0.0
    %179 = vmatprep.subr.mxu0 0.0
    %180 = vmatpush1.msra.mxu0 0.0
    %181 = vmatprep.subr.mxu0 0.0
    %182 = vmatpush1.msra.mxu0 0.0
    %183 = vmatprep.subr.mxu0 0.0
    %184 = vmatpush1.msra.mxu0 0.0
    %185 = vmatprep.subr.mxu0 0.0
    %186 = vmatpush1.msra.mxu0 0.0
    %187 = vmatprep.subr.mxu0 0.0
    %188 = vmatpush1.msra.mxu0 0.0
    %189 = vmatprep.subr.mxu0 0.0
    %190 = vmatpush1.msra.mxu0 0.0
    %191 = vmatprep.subr.mxu0 0.0
    %192 = vmatpush1.msra.mxu0 0.0
    %193 = vmatprep.subr.mxu0 0.0
    %194 = vmatpush1.msra.mxu0 0.0
    %195 = vmatprep.subr.mxu0 0.0
    %196 = vmatpush1.msra.mxu0 0.0
    %197 = vmatprep.subr.mxu0 0.0
    %198 = vmatpush1.msra.mxu0 0.0
    %199 = vmatprep.subr.mxu0 0.0
    %200 = vmatpush1.msra.mxu0 0.0
    %201 = vmatprep.subr.mxu0 0.0
    %202 = vmatpush1.msra.mxu0 0.0
    %203 = vmatprep.subr.mxu0 0.0
    %204 = vmatpush1.msra.mxu0 0.0
    %205 = vmatprep.mubr.f32.mxu0 0.0
    %206 = vmatmul.mubr.f32.gmra.mrb[0].mxu0 %v116
    %v207 = vpop.f32.mrb[0].mxu0
    %v208 = vadd.f32 %v139, %v207
    %v209 = vpop.f32.mrb[0].mxu0
    %210 = vmatprep.mubr.f32.mxu0 0.0
    %211 = vmatmul.mubr.f32.gmra.mrb[0].mxu0 %v117
    %v212 = vpop.f32.mrb[0].mxu0
    %v213 = vadd.f32 %v139, %v212
    %v214 = vpop.f32.mrb[0].mxu0
    %215 = vdwg.mxu0
    %v216 = vtanh.pop %v208
    %v217 = vtanh.pop %v213
    %v218 = vld [vmem:[#allocation8] sm:$0xff]
    %v219 = vld [vmem:[#allocation8 + $0x8] sm:$0xff]
    %v220 = vld [vmem:[#allocation8 + $0x10] sm:$0xff]
    %v221 = vld [vmem:[#allocation8 + $0x18] sm:$0xff]
    %v222 = vld [vmem:[#allocation8 + $0x20] sm:$0xff]
    %v223 = vld [vmem:[#allocation8 + $0x28] sm:$0xff]
    %v224 = vld [vmem:[#allocation8 + $0x30] sm:$0xff]
    %v225 = vld [vmem:[#allocation8 + $0x38] sm:$0xff]
    %v226 = vld [vmem:[#allocation8 + $0x40] sm:$0xff]
    %v227 = vld [vmem:[#allocation8 + $0x48] sm:$0xff]
    %v228 = vld [vmem:[#allocation8 + $0x50] sm:$0xff]
    %v229 = vld [vmem:[#allocation8 + $0x58] sm:$0xff]
    %v230 = vld [vmem:[#allocation8 + $0x60] sm:$0xff]
    %v231 = vld [vmem:[#allocation8 + $0x68] sm:$0xff]
    %v232 = vld [vmem:[#allocation8 + $0x70] sm:$0xff]
    %v233 = vld [vmem:[#allocation8 + $0x78] sm:$0xff]
    %v234 = vld [vmem:[#allocation10] sm:$0x1]
    %v236 = vlaneseq
    %v237 = vshrl.u32 %v236, 7
    %v238 = vsub.s32 0, %v237
    %v239 = vrot.slane %v234, %v238
    %241 = vmatprep.subr.mxu0 0.0
    %242 = vmatpush1.msra.mxu0 %v218
    %243 = vmatprep.subr.mxu0 0.0
    %244 = vmatpush1.msra.mxu0 %v219
    %245 = vmatprep.subr.mxu0 0.0
    %246 = vmatpush1.msra.mxu0 %v220
    %247 = vmatprep.subr.mxu0 0.0
    %248 = vmatpush1.msra.mxu0 %v221
    %249 = vmatprep.subr.mxu0 0.0
    %250 = vmatpush1.msra.mxu0 %v222
    %251 = vmatprep.subr.mxu0 0.0
    %252 = vmatpush1.msra.mxu0 %v223
    %253 = vmatprep.subr.mxu0 0.0
    %254 = vmatpush1.msra.mxu0 %v224
    %255 = vmatprep.subr.mxu0 0.0
    %256 = vmatpush1.msra.mxu0 %v225
    %257 = vmatprep.subr.mxu0 0.0
    %258 = vmatpush1.msra.mxu0 %v226
    %259 = vmatprep.subr.mxu0 0.0
    %260 = vmatpush1.msra.mxu0 %v227
    %261 = vmatprep.subr.mxu0 0.0
    %262 = vmatpush1.msra.mxu0 %v228
    %263 = vmatprep.subr.mxu0 0.0
    %264 = vmatpush1.msra.mxu0 %v229
    %265 = vmatprep.subr.mxu0 0.0
    %266 = vmatpush1.msra.mxu0 %v230
    %267 = vmatprep.subr.mxu0 0.0
    %268 = vmatpush1.msra.mxu0 %v231
    %269 = vmatprep.subr.mxu0 0.0
    %270 = vmatpush1.msra.mxu0 %v232
    %271 = vmatprep.subr.mxu0 0.0
    %272 = vmatpush1.msra.mxu0 %v233
    %273 = vmatprep.subr.mxu0 0.0
    %274 = vmatpush1.msra.mxu0 0.0
    %275 = vmatprep.subr.mxu0 0.0
    %276 = vmatpush1.msra.mxu0 0.0
    %277 = vmatprep.subr.mxu0 0.0
    %278 = vmatpush1.msra.mxu0 0.0
    %279 = vmatprep.subr.mxu0 0.0
    %280 = vmatpush1.msra.mxu0 0.0
    %281 = vmatprep.subr.mxu0 0.0
    %282 = vmatpush1.msra.mxu0 0.0
    %283 = vmatprep.subr.mxu0 0.0
    %284 = vmatpush1.msra.mxu0 0.0
    %285 = vmatprep.subr.mxu0 0.0
    %286 = vmatpush1.msra.mxu0 0.0
    %287 = vmatprep.subr.mxu0 0.0
    %288 = vmatpush1.msra.mxu0 0.0
    %289 = vmatprep.subr.mxu0 0.0
    %290 = vmatpush1.msra.mxu0 0.0
    %291 = vmatprep.subr.mxu0 0.0
    %292 = vmatpush1.msra.mxu0 0.0
    %293 = vmatprep.subr.mxu0 0.0
    %294 = vmatpush1.msra.mxu0 0.0
    %295 = vmatprep.subr.mxu0 0.0
    %296 = vmatpush1.msra.mxu0 0.0
    %297 = vmatprep.subr.mxu0 0.0
    %298 = vmatpush1.msra.mxu0 0.0
    %299 = vmatprep.subr.mxu0 0.0
    %300 = vmatpush1.msra.mxu0 0.0
    %301 = vmatprep.subr.mxu0 0.0
    %302 = vmatpush1.msra.mxu0 0.0
    %303 = vmatprep.subr.mxu0 0.0
    %304 = vmatpush1.msra.mxu0 0.0
    %305 = vmatprep.mubr.f32.mxu0 0.0
    %306 = vmatmul.mubr.f32.gmra.mrb[0].mxu0 %v216
    %v307 = vpop.f32.mrb[0].mxu0
    %v308 = vadd.f32 %v239, %v307
    %v309 = vpop.f32.mrb[0].mxu0
    %310 = vmatprep.mubr.f32.mxu0 0.0
    %311 = vmatmul.mubr.f32.gmra.mrb[0].mxu0 %v217
    %v312 = vpop.f32.mrb[0].mxu0
    %v313 = vadd.f32 %v239, %v312
    %v314 = vpop.f32.mrb[0].mxu0
    %315 = vdwg.mxu0
    %v316 = vtanh.pop %v308
    %v317 = vtanh.pop %v313
    %v318 = vld [vmem:[#allocation11] sm:$0xff]
    %v319 = vld [vmem:[#allocation11 + $0x8] sm:$0xff]
    %v320 = vld [vmem:[#allocation11 + $0x10] sm:$0xff]
    %v321 = vld [vmem:[#allocation11 + $0x18] sm:$0xff]
    %v322 = vld [vmem:[#allocation11 + $0x20] sm:$0xff]
    %v323 = vld [vmem:[#allocation11 + $0x28] sm:$0xff]
    %v324 = vld [vmem:[#allocation11 + $0x30] sm:$0xff]
    %v325 = vld [vmem:[#allocation11 + $0x38] sm:$0xff]
    %v326 = vld [vmem:[#allocation11 + $0x40] sm:$0xff]
    %v327 = vld [vmem:[#allocation11 + $0x48] sm:$0xff]
    %v328 = vld [vmem:[#allocation11 + $0x50] sm:$0xff]
    %v329 = vld [vmem:[#allocation11 + $0x58] sm:$0xff]
    %v330 = vld [vmem:[#allocation11 + $0x60] sm:$0xff]
    %v331 = vld [vmem:[#allocation11 + $0x68] sm:$0xff]
    %v332 = vld [vmem:[#allocation11 + $0x70] sm:$0xff]
    %v333 = vld [vmem:[#allocation11 + $0x78] sm:$0xff]
    %v334 = vld [vmem:[#allocation13] sm:$0x1]
    %v336 = vlaneseq
    %v337 = vshrl.u32 %v336, 7
    %v338 = vsub.s32 0, %v337
    %v339 = vrot.slane %v334, %v338
    %341 = vmatprep.subr.mxu0 0.0
    %342 = vmatpush1.msra.mxu0 %v318
    %343 = vmatprep.subr.mxu0 0.0
    %344 = vmatpush1.msra.mxu0 %v319
    %345 = vmatprep.subr.mxu0 0.0
    %346 = vmatpush1.msra.mxu0 %v320
    %347 = vmatprep.subr.mxu0 0.0
    %348 = vmatpush1.msra.mxu0 %v321
    %349 = vmatprep.subr.mxu0 0.0
    %350 = vmatpush1.msra.mxu0 %v322
    %351 = vmatprep.subr.mxu0 0.0
    %352 = vmatpush1.msra.mxu0 %v323
    %353 = vmatprep.subr.mxu0 0.0
    %354 = vmatpush1.msra.mxu0 %v324
    %355 = vmatprep.subr.mxu0 0.0
    %356 = vmatpush1.msra.mxu0 %v325
    %357 = vmatprep.subr.mxu0 0.0
    %358 = vmatpush1.msra.mxu0 %v326
    %359 = vmatprep.subr.mxu0 0.0
    %360 = vmatpush1.msra.mxu0 %v327
    %361 = vmatprep.subr.mxu0 0.0
    %362 = vmatpush1.msra.mxu0 %v328
    %363 = vmatprep.subr.mxu0 0.0
    %364 = vmatpush1.msra.mxu0 %v329
    %365 = vmatprep.subr.mxu0 0.0
    %366 = vmatpush1.msra.mxu0 %v330
    %367 = vmatprep.subr.mxu0 0.0
    %368 = vmatpush1.msra.mxu0 %v331
    %369 = vmatprep.subr.mxu0 0.0
    %370 = vmatpush1.msra.mxu0 %v332
    %371 = vmatprep.subr.mxu0 0.0
    %372 = vmatpush1.msra.mxu0 %v333
    %373 = vmatprep.subr.mxu0 0.0
    %374 = vmatpush1.msra.mxu0 0.0
    %375 = vmatprep.subr.mxu0 0.0
    %376 = vmatpush1.msra.mxu0 0.0
    %377 = vmatprep.subr.mxu0 0.0
    %378 = vmatpush1.msra.mxu0 0.0
    %379 = vmatprep.subr.mxu0 0.0
    %380 = vmatpush1.msra.mxu0 0.0
    %381 = vmatprep.subr.mxu0 0.0
    %382 = vmatpush1.msra.mxu0 0.0
    %383 = vmatprep.subr.mxu0 0.0
    %384 = vmatpush1.msra.mxu0 0.0
    %385 = vmatprep.subr.mxu0 0.0
    %386 = vmatpush1.msra.mxu0 0.0
    %387 = vmatprep.subr.mxu0 0.0
    %388 = vmatpush1.msra.mxu0 0.0
    %389 = vmatprep.subr.mxu0 0.0
    %390 = vmatpush1.msra.mxu0 0.0
    %391 = vmatprep.subr.mxu0 0.0
    %392 = vmatpush1.msra.mxu0 0.0
    %393 = vmatprep.subr.mxu0 0.0
    %394 = vmatpush1.msra.mxu0 0.0
    %395 = vmatprep.subr.mxu0 0.0
    %396 = vmatpush1.msra.mxu0 0.0
    %397 = vmatprep.subr.mxu0 0.0
    %398 = vmatpush1.msra.mxu0 0.0
    %399 = vmatprep.subr.mxu0 0.0
    %400 = vmatpush1.msra.mxu0 0.0
    %401 = vmatprep.subr.mxu0 0.0
    %402 = vmatpush1.msra.mxu0 0.0
    %403 = vmatprep.subr.mxu0 0.0
    %404 = vmatpush1.msra.mxu0 0.0
    %405 = vmatprep.mubr.f32.mxu0 0.0
    %406 = vmatmul.mubr.f32.gmra.mrb[0].mxu0 %v316
    %v407 = vpop.f32.mrb[0].mxu0
    %v408 = vadd.f32 %v339, %v407
    %v409 = vpop.f32.mrb[0].mxu0
    %410 = vmatprep.mubr.f32.mxu0 0.0
    %411 = vmatmul.mubr.f32.gmra.mrb[0].mxu0 %v317
    %v412 = vpop.f32.mrb[0].mxu0
    %v413 = vadd.f32 %v339, %v412
    %v414 = vpop.f32.mrb[0].mxu0
    %415 = vdwg.mxu0
    %416 = vst [vmem:[#allocation14] sm:$0xff] %v408
    %417 = vst [vmem:[#allocation14 + $0x8] sm:$0xff] %v413
    // Predicated region
    $region58: #{tpu_custom_call.1} parent=1 // pred_check
      _
    $region59: #{tpu_custom_call.1} parent=1 // pred_check_branch
      %419 = sbr.rel (0) target = $region61
    $region60: #{tpu_custom_call.1} parent=1 // pred_region
      %s421 = ssub.s32 256, 256
      %422 = vsyncadd [#allocation4], %s421
      %s423 = sshll.u32 [#allocation14], 4
      %s424 = int_to_ptr.vmem [resolvable:$true] %s423
      %429 = dma.vmem_to_hbm [thread:$0]  %s424, 256, %s7, [#allocation4], 128, 128, 8
    $region61: #{tpu_custom_call.1} parent=1 // pred_fallthru
      _
    // Predicated region
    $region62: #{tpu_custom_call.1} parent=1 // pred_check
      _
    $region63: #{tpu_custom_call.1} parent=1 // pred_check_branch
      %431 = sbr.rel (0) target = $region65
    $region64: #{tpu_custom_call.1} parent=1 // pred_region
      %432 = dma.done [#allocation4], 256
    $region65: #{tpu_custom_call.1} parent=1 // pred_fallthru
      _
    %433 = vsyncpa [#allocation3], 1
    %434 = vsyncpa [#allocation6], 1
    %435 = vsyncpa [#allocation9], 1
    %436 = vsyncpa [#allocation12], 1
    %437 = vsyncpa [#allocation4], 1

</llo_original>
